<compile_context>
chip_gen: v7x
topology: tpu7x:2x2x1
jax: 0.10.0
libtpu: 0.0.40
codegen_flags: <defaults>
</compile_context>

<pallas_src>
from functools import partial

import jax
import jax.numpy as jnp
import numpy as np
from jax.experimental import pallas as pl
from jax.experimental.pallas import tpu as pltpu

EPS = 1e-8
_LANE = 128


def _vmem_limit_bytes():
    """Generation-aware scoped-VMEM limit (~3/4 of physical VMEM)."""
    try:
        cap = int(pltpu.get_tpu_info().vmem_capacity_bytes)
    except Exception:
        cap = 64 * 1024 * 1024  # v7x floor — safe on every generation
    return (cap * 3) // 4


def _tiling(n, d, itemsize, vmem_limit):
    """Pick a lane-dense feature tile and grid length.

    Per grid step the live footprint is roughly
        n * tile_d * (2*itemsize   # double-buffered input block
                      + 2*itemsize # double-buffered output block
                      + 8)         # ~2 f32 in-kernel temporaries
    which must stay (with margin) under the scoped-VMEM limit.
    """
    per_col = n * (4 * itemsize + 8) + 256
    budget = max(vmem_limit - (4 << 20), 2 << 20)
    max_tile = max(_LANE, (budget // per_col) // _LANE * _LANE)

    if d < 2 * _LANE:
        # Single full-width tile; block last dim == array dim is always legal.
        return d, 1

    d_cols = pl.cdiv(d, _LANE)
    # >= 2 (target 4) grid steps: enables pipelining + v7x megacore split.
    target_steps = min(4, d_cols)
    tile_cols = max(1, min(max_tile // _LANE, d_cols // target_steps))
    tile_d = tile_cols * _LANE
    return tile_d, pl.cdiv(d, tile_d)


def _rms_update_kernel(x_ref, mean_ref, var_ref, count_ref,
                       out_ref, new_mean_ref, new_var_ref,
                       *, batch_count, epsilon):
    """One feature tile: fused batch moments + Welford merge + normalization
    with the *updated* stats (matches PyTorch forward with update=True)."""
    inv_n = 1.0 / batch_count

    # Pass 1: batch mean (reduction over the batch/sublane axis).
    batch_mean = jnp.sum(x_ref[...].astype(jnp.float32),
                         axis=0, keepdims=True) * inv_n            # (1, TILE_D)

    # Pass 2: two-pass (centered) variance — better precision than E[x^2]-m^2,
    # and the extra VMEM re-read is free in a memory-bound kernel.
    centered = x_ref[...].astype(jnp.float32) - batch_mean
    batch_var = jnp.sum(centered * centered, axis=0, keepdims=True) * inv_n

    mean = mean_ref[...]                                            # (1, TILE_D)
    var = var_ref[...]                                              # (1, TILE_D)
    count = count_ref[0]                                            # SMEM scalar

    # Scalar merge coefficients (scalar unit); broadcast only in the fused
    # vector expressions below.
    tot_count = count + batch_count
    inv_tot = 1.0 / tot_count
    coef_mean = batch_count * inv_tot
    coef_delta2 = count * batch_count * inv_tot

    delta = batch_mean - mean
    new_mean = mean + delta * coef_mean
    m2 = var * count + batch_var * batch_count + (delta * delta) * coef_delta2
    new_var = m2 * inv_tot

    new_mean_ref[...] = new_mean
    new_var_ref[...] = new_var

    # Pass 3: normalize with the updated stats; re-read x_ref so the f32
    # moment temporaries do not stay live across the whole kernel.
    out_ref[...] = ((x_ref[...].astype(jnp.float32) - new_mean)
                    * jax.lax.rsqrt(new_var + epsilon)).astype(out_ref.dtype)


def _rms_norm_kernel(x_ref, mean_ref, var_ref, out_ref, *, epsilon):
    """Normalization only (update=False path)."""
    out_ref[...] = ((x_ref[...].astype(jnp.float32) - mean_ref[...])
                    * jax.lax.rsqrt(var_ref[...] + epsilon)).astype(out_ref.dtype)


def running_mean_std_forward(obs, running_mean, running_var, count,
                             update=True, epsilon=EPS):
    """obs: (N, D); running_mean/var: (D,) f32; count: () f32.

    Returns (normalized_obs, new_running_mean, new_running_var, new_count).
    """
    n, d = obs.shape
    itemsize = int(np.dtype(obs.dtype).itemsize)
    vmem_limit = _vmem_limit_bytes()
    tile_d, num_tiles = _tiling(n, d, itemsize, vmem_limit)
    grid = (num_tiles,)

    mean2d = running_mean.astype(jnp.float32).reshape(1, d)
    var2d = running_var.astype(jnp.float32).reshape(1, d)

    x_spec = pl.BlockSpec((n, tile_d), lambda j: (0, j))
    row_spec = pl.BlockSpec((1, tile_d), lambda j: (0, j))
    smem_spec = pl.BlockSpec(memory_space=pltpu.SMEM)
    cparams = pltpu.CompilerParams(
        dimension_semantics=("parallel",),
        vmem_limit_bytes=int(vmem_limit),
    )

    if update:
        cnt1d = jnp.asarray(count, jnp.float32).reshape(1)
        cost = pl.CostEstimate(
            flops=8 * n * d + 16 * d,
            transcendentals=d,
            bytes_accessed=2 * n * d * itemsize + 5 * d * 4,
        )
        out, new_mean2d, new_var2d = pl.pallas_call(
            partial(_rms_update_kernel,
                    batch_count=float(n), epsilon=float(epsilon)),
            grid=grid,
            out_shape=(
                jax.ShapeDtypeStruct((n, d), obs.dtype),
                jax.ShapeDtypeStruct((1, d), jnp.float32),
                jax.ShapeDtypeStruct((1, d), jnp.float32),
            ),
            in_specs=[x_spec, row_spec, row_spec, smem_spec],
            out_specs=(x_spec, row_spec, row_spec),
            # running stats updated in place (true in-place only if donated at
            # a jit boundary; otherwise XLA inserts a defensive copy).
            input_output_aliases={1: 1, 2: 2},
            compiler_params=cparams,
            cost_estimate=cost,
        )(obs, mean2d, var2d, cnt1d)

        new_count = (jnp.asarray(count, jnp.float32) + jnp.float32(n)).reshape(())
        return out, new_mean2d[0], new_var2d[0], new_count
    else:
        cost = pl.CostEstimate(
            flops=3 * n * d,
            transcendentals=d,
            bytes_accessed=2 * n * d * itemsize + 2 * d * 4,
        )
        out = pl.pallas_call(
            partial(_rms_norm_kernel, epsilon=float(epsilon)),
            grid=grid,
            out_shape=jax.ShapeDtypeStruct((n, d), obs.dtype),
            in_specs=[x_spec, row_spec, row_spec],
            out_specs=x_spec,
            compiler_params=cparams,
            cost_estimate=cost,
        )(obs, mean2d, var2d)
        return out, running_mean, running_var, count


def _reference(obs, mean, var, count, eps=EPS):
    obs = np.asarray(obs, np.float64)
    mean = np.asarray(mean, np.float64)
    var = np.asarray(var, np.float64)
    count = float(count)
    bm = obs.mean(axis=0)
    bv = obs.var(axis=0)          # correction=0
    bc = obs.shape[0]
    delta = bm - mean
    tot = count + bc
    new_mean = mean + delta * bc / tot
    m2 = var * count + bv * bc + np.square(delta) * count * bc / tot
    new_var = m2 / tot
    out = (obs - new_mean) / np.sqrt(new_var + eps)
    return out, new_mean, new_var, tot


def _check_case(key, n, d):
    obs = jax.random.normal(key, (n, d), dtype=jnp.float32) * 2.0 + 0.5
    rm = jnp.zeros((d,), jnp.float32)
    rv = jnp.ones((d,), jnp.float32)
    cnt = jnp.ones((), jnp.float32)

    obs_np = np.asarray(obs)
    out, nm, nv, nc = running_mean_std_forward(obs, rm, rv, cnt, update=True)
    jax.block_until_ready((out, nm, nv, nc))

    r_out, r_m, r_v, r_c = _reference(obs_np, np.zeros(d), np.ones(d), 1.0)
    np.testing.assert_allclose(np.asarray(out), r_out, rtol=1e-4, atol=1e-4)
    np.testing.assert_allclose(np.asarray(nm), r_m, rtol=1e-5, atol=1e-5)
    np.testing.assert_allclose(np.asarray(nv), r_v, rtol=1e-5, atol=1e-5)
    np.testing.assert_allclose(float(nc), r_c, rtol=0, atol=0)
    return obs, nm, nv, nc


if __name__ == "__main__":
    key = jax.random.PRNGKey(0)
    keys = jax.random.split(key, 4)

    # Primary small case (PPO-style obs normalization): single narrow tile.
    obs, nm, nv, nc = _check_case(keys[0], 8, 32)

    # update=False path (normalize with the stats just produced).
    out2, _, _, _ = running_mean_std_forward(obs, nm, nv, nc, update=False)
    jax.block_until_ready(out2)
    ref_out2 = (np.asarray(obs) - np.asarray(nm)) / np.sqrt(np.asarray(nv) + EPS)
    np.testing.assert_allclose(np.asarray(out2), ref_out2, rtol=1e-4, atol=1e-4)

    # Non-multiple-of-128 D, single full-width tile (no pad / no slice).
    _check_case(keys[1], 16, 130)

    # Ragged multi-tile D (>256, not a multiple of 128): exercises Pallas
    # partial edge blocks on the last grid step.
    _check_case(keys[2], 16, 434)

    # Clean multi-tile D: grid of 4 parallel feature tiles.
    _check_case(keys[3], 32, 512)

    print("KERNEL_OK")
</pallas_src>

<mosaic_0001>
module attributes {stable_mosaic.version = 11 : i64} {
  func.func @_rms_update_kernel(%arg0: i32, %arg1: memref<8x32xf32, #tpu.memory_space<vmem>>, %arg2: memref<1x32xf32, #tpu.memory_space<vmem>>, %arg3: memref<1x32xf32, #tpu.memory_space<vmem>>, %arg4: memref<1xf32, #tpu.memory_space<smem>>, %arg5: memref<8x32xf32, #tpu.memory_space<vmem>>, %arg6: memref<1x32xf32, #tpu.memory_space<vmem>>, %arg7: memref<1x32xf32, #tpu.memory_space<vmem>>) attributes {dimension_semantics = [#tpu.dimension_semantics<parallel>], iteration_bounds = array<i64: 1>, scalar_prefetch = 0 : i64, scratch_operands = 0 : i64, tpu.core_type = #tpu.core_type<tc>, window_params = [{transform_indices = @transform_0, window_bounds = array<i64: 8, 32>}, {transform_indices = @transform_1, window_bounds = array<i64: 1, 32>}, {transform_indices = @transform_2, window_bounds = array<i64: 1, 32>}, {transform_indices = @transform_3, window_bounds = array<i64: 1>}, {transform_indices = @transform_4, window_bounds = array<i64: 8, 32>}, {transform_indices = @transform_5, window_bounds = array<i64: 1, 32>}, {transform_indices = @transform_6, window_bounds = array<i64: 1, 32>}]} {
    %c0 = arith.constant 0 : index
    %c0_0 = arith.constant 0 : index
    %0 = vector.load %arg1[%c0, %c0_0] : memref<8x32xf32, #tpu.memory_space<vmem>>, vector<8x32xf32>
    %cst = arith.constant dense<0.000000e+00> : vector<32xf32>
    %1 = vector.multi_reduction <add>, %0, %cst [0] : vector<8x32xf32> to vector<32xf32>
    %2 = vector.shape_cast %1 : vector<32xf32> to vector<1x32xf32>
    %cst_1 = arith.constant 1.250000e-01 : f32
    %3 = vector.broadcast %cst_1 : f32 to vector<1x32xf32>
    %4 = arith.mulf %2, %3 : vector<1x32xf32>
    %c0_2 = arith.constant 0 : index
    %c0_3 = arith.constant 0 : index
    %5 = vector.load %arg1[%c0_2, %c0_3] : memref<8x32xf32, #tpu.memory_space<vmem>>, vector<8x32xf32>
    %6 = vector.broadcast %4 : vector<1x32xf32> to vector<8x32xf32>
    %7 = arith.subf %5, %6 : vector<8x32xf32>
    %8 = arith.mulf %7, %7 : vector<8x32xf32>
    %cst_4 = arith.constant dense<0.000000e+00> : vector<32xf32>
    %9 = vector.multi_reduction <add>, %8, %cst_4 [0] : vector<8x32xf32> to vector<32xf32>
    %10 = vector.shape_cast %9 : vector<32xf32> to vector<1x32xf32>
    %cst_5 = arith.constant 1.250000e-01 : f32
    %11 = vector.broadcast %cst_5 : f32 to vector<1x32xf32>
    %12 = arith.mulf %10, %11 : vector<1x32xf32>
    %c0_6 = arith.constant 0 : index
    %c0_7 = arith.constant 0 : index
    %13 = vector.load %arg2[%c0_6, %c0_7] : memref<1x32xf32, #tpu.memory_space<vmem>>, vector<1x32xf32>
    %c0_8 = arith.constant 0 : index
    %c0_9 = arith.constant 0 : index
    %14 = vector.load %arg3[%c0_8, %c0_9] : memref<1x32xf32, #tpu.memory_space<vmem>>, vector<1x32xf32>
    %c0_10 = arith.constant 0 : index
    %15 = memref.load %arg4[%c0_10] : memref<1xf32, #tpu.memory_space<smem>>
    %cst_11 = arith.constant 8.000000e+00 : f32
    %16 = arith.addf %15, %cst_11 : f32
    %cst_12 = arith.constant 1.000000e+00 : f32
    %17 = arith.divf %cst_12, %16 : f32
    %cst_13 = arith.constant 8.000000e+00 : f32
    %18 = arith.mulf %cst_13, %17 : f32
    %cst_14 = arith.constant 8.000000e+00 : f32
    %19 = arith.mulf %15, %cst_14 : f32
    %20 = arith.mulf %19, %17 : f32
    %21 = arith.subf %4, %13 : vector<1x32xf32>
    %22 = vector.broadcast %18 : f32 to vector<1x32xf32>
    %23 = arith.mulf %21, %22 : vector<1x32xf32>
    %24 = arith.addf %13, %23 : vector<1x32xf32>
    %25 = vector.broadcast %15 : f32 to vector<1x32xf32>
    %26 = arith.mulf %14, %25 : vector<1x32xf32>
    %cst_15 = arith.constant 8.000000e+00 : f32
    %27 = vector.broadcast %cst_15 : f32 to vector<1x32xf32>
    %28 = arith.mulf %12, %27 : vector<1x32xf32>
    %29 = arith.addf %26, %28 : vector<1x32xf32>
    %30 = arith.mulf %21, %21 : vector<1x32xf32>
    %31 = vector.broadcast %20 : f32 to vector<1x32xf32>
    %32 = arith.mulf %30, %31 : vector<1x32xf32>
    %33 = arith.addf %29, %32 : vector<1x32xf32>
    %34 = vector.broadcast %17 : f32 to vector<1x32xf32>
    %35 = arith.mulf %33, %34 : vector<1x32xf32>
    %c0_16 = arith.constant 0 : index
    %c0_17 = arith.constant 0 : index
    %36 = vector.load %arg6[%c0_16, %c0_17] : memref<1x32xf32, #tpu.memory_space<vmem>>, vector<1x32xf32>
    tpu.vector_store %arg6[%c0_16, %c0_17], %24 {strides = array<i32>} : memref<1x32xf32, #tpu.memory_space<vmem>>, vector<1x32xf32>,
    %c0_18 = arith.constant 0 : index
    %c0_19 = arith.constant 0 : index
    %37 = vector.load %arg7[%c0_18, %c0_19] : memref<1x32xf32, #tpu.memory_space<vmem>>, vector<1x32xf32>
    tpu.vector_store %arg7[%c0_18, %c0_19], %35 {strides = array<i32>} : memref<1x32xf32, #tpu.memory_space<vmem>>, vector<1x32xf32>,
    %c0_20 = arith.constant 0 : index
    %c0_21 = arith.constant 0 : index
    %38 = vector.load %arg1[%c0_20, %c0_21] : memref<8x32xf32, #tpu.memory_space<vmem>>, vector<8x32xf32>
    %39 = vector.broadcast %24 : vector<1x32xf32> to vector<8x32xf32>
    %40 = arith.subf %38, %39 : vector<8x32xf32>
    %cst_22 = arith.constant 9.99999993E-9 : f32
    %41 = vector.broadcast %cst_22 : f32 to vector<1x32xf32>
    %42 = arith.addf %35, %41 : vector<1x32xf32>
    %43 = math.rsqrt %42 : vector<1x32xf32>
    %44 = vector.broadcast %43 : vector<1x32xf32> to vector<8x32xf32>
    %45 = arith.mulf %40, %44 : vector<8x32xf32>
    %c0_23 = arith.constant 0 : index
    %c0_24 = arith.constant 0 : index
    %46 = vector.load %arg5[%c0_23, %c0_24] : memref<8x32xf32, #tpu.memory_space<vmem>>, vector<8x32xf32>
    tpu.vector_store %arg5[%c0_23, %c0_24], %45 {strides = array<i32>} : memref<8x32xf32, #tpu.memory_space<vmem>>, vector<8x32xf32>,
    return
  }
  func.func @transform_0(%arg0: i32) -> (i32, i32) {
    %c0_i32 = arith.constant 0 : i32
    %c0_i32_0 = arith.constant 0 : i32
    return %c0_i32, %arg0 : i32, i32
  }
  func.func @transform_1(%arg0: i32) -> (i32, i32) {
    %c0_i32 = arith.constant 0 : i32
    %c0_i32_0 = arith.constant 0 : i32
    return %c0_i32, %arg0 : i32, i32
  }
  func.func @transform_2(%arg0: i32) -> (i32, i32) {
    %c0_i32 = arith.constant 0 : i32
    %c0_i32_0 = arith.constant 0 : i32
    return %c0_i32, %arg0 : i32, i32
  }
  func.func @transform_3(%arg0: i32) -> i32 {
    %c0_i32 = arith.constant 0 : i32
    %c0_i32_0 = arith.constant 0 : i32
    return %c0_i32 : i32
  }
  func.func @transform_4(%arg0: i32) -> (i32, i32) {
    %c0_i32 = arith.constant 0 : i32
    %c0_i32_0 = arith.constant 0 : i32
    return %c0_i32, %arg0 : i32, i32
  }
  func.func @transform_5(%arg0: i32) -> (i32, i32) {
    %c0_i32 = arith.constant 0 : i32
    %c0_i32_0 = arith.constant 0 : i32
    return %c0_i32, %arg0 : i32, i32
  }
  func.func @transform_6(%arg0: i32) -> (i32, i32) {
    %c0_i32 = arith.constant 0 : i32
    %c0_i32_0 = arith.constant 0 : i32
    return %c0_i32, %arg0 : i32, i32
  }
}

</mosaic_0001>

<llo_original>
// kernel: tpu_custom_call.1
$region0: #{tpu_custom_call.1}
  #allocation0 [shape = 'u32[]', space=smem, size = 0x4, offset = 0x4, fixed_abs, tag = 'smem constant byte address 0x4 - core index']
  #allocation1 [shape = 'u32[144,128]{1,0:T(1,128)}', space=vmem, size = 0x12000, scoped, tag = 'internal scratch']
  #allocation2 [shape = 'f32[1]{0:T(128)S(6)}', space=smem, size = 0x200, scoped, tag = 'scoped memory for tpu_custom_call.1']
  %s0 = inlined_call_operand.vmem [shape: f32[8,32], index: 0, kind: input, shape index: {}]
  %s1 = inlined_call_operand.hbm [shape: f32[1,32], index: 1, kind: input, shape index: {}, may-alias: {1,5}]
  %s2 = inlined_call_operand.hbm [shape: f32[1,32], index: 2, kind: input, shape index: {}, may-alias: {2,6}]
  %s3 = inlined_call_operand.<no memory space> [shape: f32[1], index: 3, kind: input, shape index: {}]
  %s4 = inlined_call_operand.hbm [shape: f32[8,32], index: 4, kind: output, shape index: {0}]
  %s5 = inlined_call_operand.hbm [shape: f32[1,32], index: 5, kind: output, shape index: {1}, may-alias: {1,5}]
  %s6 = inlined_call_operand.hbm [shape: f32[1,32], index: 6, kind: output, shape index: {2}, may-alias: {2,6}]
  %7 = xla_tuple %s4, %s5, %s6
  %s8 = sld [smem:[#allocation0]]
  $region50: #{tpu_custom_call.1} parent=0
    _
  %s10 = ssub.s32 1, %s8
  %s11 = scalar_select 0, %s10, %s8
  %12 = sst [smem:[#allocation2]] %s3
  $region1: #{tpu_custom_call.1} parent=0
    #allocation3 [shape = 'u8[512]{0}', space=vmem, size = 0x400, scoped, tag = 'input window, operand 1, single buffered']
    #allocation4 [shape = 's32[1]{0}', space=sflag, size = 0x4, scoped, tag = 'scoped memory for tpu_custom_call.1']
    #allocation5 [shape = 's32[1]{0}', space=sflag, size = 0x4, scoped, tag = 'scoped memory for tpu_custom_call.1']
    #allocation6 [shape = 'u8[512]{0}', space=vmem, size = 0x400, scoped, tag = 'input window, operand 2, single buffered']
    #allocation7 [shape = 's32[1]{0}', space=sflag, size = 0x4, scoped, tag = 'scoped memory for tpu_custom_call.1']
    #allocation8 [shape = 'u8[4096]{0}', space=vmem, size = 0x1000, scoped, tag = 'output window, operand 0, single buffered']
    #allocation9 [shape = 'u8[512]{0}', space=vmem, size = 0x400, scoped, tag = 'output window, operand 1, single buffered']
    #allocation10 [shape = 's32[1]{0}', space=sflag, size = 0x4, scoped, tag = 'scoped memory for tpu_custom_call.1']
    #allocation11 [shape = 'u8[512]{0}', space=vmem, size = 0x400, scoped, tag = 'output window, operand 2, single buffered']
    %13 = vsyncpa [#allocation4], 0
    %14 = vsyncpa [#allocation7], 0
    %15 = vsyncpa [#allocation5], 0
    %16 = vsyncpa [#allocation10], 0
    // Predicated region
    $region2: #{tpu_custom_call.1} parent=1 // pred_check
      _
    $region3: #{tpu_custom_call.1} parent=1 // pred_check_branch
      %18 = sbr.rel (0) target = $region5
    $region4: #{tpu_custom_call.1} parent=1 // pred_region
      _
    $region5: #{tpu_custom_call.1} parent=1 // pred_fallthru
      _
    // Predicated region
    $region6: #{tpu_custom_call.1} parent=1 // pred_check
      _
    $region7: #{tpu_custom_call.1} parent=1 // pred_check_branch
      %20 = sbr.rel (0) target = $region9
    $region8: #{tpu_custom_call.1} parent=1 // pred_region
      %s22 = ssub.s32 16, 16
      %23 = vsyncadd [#allocation4], %s22
      %s25 = sshll.u32 [#allocation3], 4
      %s26 = int_to_ptr.vmem [resolvable:$true] %s25
      %28 = dma.hbm_to_vmem [thread:$0]  %s1, 16, %s26, [#allocation4]
    $region9: #{tpu_custom_call.1} parent=1 // pred_fallthru
      _
    // Predicated region
    $region10: #{tpu_custom_call.1} parent=1 // pred_check
      _
    $region11: #{tpu_custom_call.1} parent=1 // pred_check_branch
      %30 = sbr.rel (0) target = $region13
    $region12: #{tpu_custom_call.1} parent=1 // pred_region
      %s32 = ssub.s32 16, 16
      %33 = vsyncadd [#allocation7], %s32
      %s35 = sshll.u32 [#allocation6], 4
      %s36 = int_to_ptr.vmem [resolvable:$true] %s35
      %38 = dma.hbm_to_vmem [thread:$0]  %s2, 16, %s36, [#allocation7]
    $region13: #{tpu_custom_call.1} parent=1 // pred_fallthru
      _
    // Predicated region
    $region14: #{tpu_custom_call.1} parent=1 // pred_check
      _
    $region15: #{tpu_custom_call.1} parent=1 // pred_check_branch
      %40 = sbr.rel (0) target = $region17
    $region16: #{tpu_custom_call.1} parent=1 // pred_region
      _
    $region17: #{tpu_custom_call.1} parent=1 // pred_fallthru
      _
    // Predicated region
    $region18: #{tpu_custom_call.1} parent=1 // pred_check
      _
    $region19: #{tpu_custom_call.1} parent=1 // pred_check_branch
      %42 = sbr.rel (0) target = $region21
    $region20: #{tpu_custom_call.1} parent=1 // pred_region
      %43 = dma.done [#allocation4], 16
    $region21: #{tpu_custom_call.1} parent=1 // pred_fallthru
      _
    // Predicated region
    $region22: #{tpu_custom_call.1} parent=1 // pred_check
      _
    $region23: #{tpu_custom_call.1} parent=1 // pred_check_branch
      %45 = sbr.rel (0) target = $region25
    $region24: #{tpu_custom_call.1} parent=1 // pred_region
      %46 = dma.done [#allocation7], 16
    $region25: #{tpu_custom_call.1} parent=1 // pred_fallthru
      _
    %v47 = vld [vmem:[%s0] sm:$0xff]
    %vm48 = vcmask 261120
    %v49 = vsel %vm48, %v47, 0.0
    %v50 = vrot.slane %v49, 4
    %v51 = vadd.f32 %v49, %v50
    %v52 = vrot.slane %v51, 2
    %v53 = vadd.f32 %v51, %v52
    %v54 = vrot.slane %v53, 1
    %v55 = vadd.f32 %v53, %v54
    %v56 = vmul.f32 %v55, 0.125
    %v57 = vsub.f32 %v47, %v56
    %v58 = vmul.f32 %v57, %v57
    %v59 = vsel %vm48, %v58, 0.0
    %v60 = vrot.slane %v59, 4
    %v61 = vadd.f32 %v59, %v60
    %v62 = vrot.slane %v61, 2
    %v63 = vadd.f32 %v61, %v62
    %v64 = vrot.slane %v63, 1
    %v65 = vadd.f32 %v63, %v64
    %v66 = vmul.f32 %v65, 0.125
    %v67 = vld [vmem:[#allocation3] sm:$0x1]
    %v68 = vld [vmem:[#allocation6] sm:$0x1]
    %s69 = sld [smem:[#allocation2]]
    %s70 = sadd.f32 %s69, 8.0
    %v71 = vstv %s70
    %v72 = vrcp.pop %v71
    %s73 = vtos %v72
    %s74 = smul.f32 %s73, 8.0
    %s75 = smul.f32 %s69, 8.0
    %s76 = smul.f32 %s75, %s73
    %v77 = vsub.f32 %v56, %v67
    %v78 = vstv %s74
    %v79 = vmul.f32 %v77, %v78
    %v80 = vadd.f32 %v67, %v79
    %v81 = vstv %s69
    %v82 = vmul.f32 %v68, %v81
    %v83 = vmul.f32 %v66, 8.0
    %v84 = vadd.f32 %v82, %v83
    %v85 = vmul.f32 %v77, %v77
    %v86 = vstv %s76
    %v87 = vmul.f32 %v85, %v86
    %v88 = vadd.f32 %v84, %v87
    %v89 = vstv %s73
    %v90 = vmul.f32 %v88, %v89
    %vm91 = vcmask 253952
    %92 = vst.msk [vmem:[#allocation9] sm:$0x1] %vm91, %v80
    %93 = vst.msk [vmem:[#allocation11] sm:$0x1] %vm91, %v90
    %v94 = vld [vmem:[%s0] sm:$0xff]
    %v96 = vlaneseq
    %v97 = vshrl.u32 %v96, 7
    %v98 = vsub.s32 0, %v97
    %v99 = vrot.slane %v80, %v98
    %v101 = vsub.f32 %v94, %v99
    %v102 = vadd.f32 %v90, 1e-08
    %v103 = vrsqrt.pop %v102
    %v105 = vlaneseq
    %v106 = vshrl.u32 %v105, 7
    %v107 = vsub.s32 0, %v106
    %v108 = vrot.slane %v103, %v107
    %v110 = vmul.f32 %v101, %v108
    %111 = vst.msk [vmem:[#allocation8] sm:$0xff] %vm48, %v110
    // Predicated region
    $region26: #{tpu_custom_call.1} parent=1 // pred_check
      _
    $region27: #{tpu_custom_call.1} parent=1 // pred_check_branch
      %113 = sbr.rel (0) target = $region29
    $region28: #{tpu_custom_call.1} parent=1 // pred_region
      %s115 = ssub.s32 128, 128
      %116 = vsyncadd [#allocation5], %s115
      %s118 = sshll.u32 [#allocation8], 4
      %s119 = int_to_ptr.vmem [resolvable:$true] %s118
      %121 = dma.vmem_to_hbm [thread:$0]  %s119, 128, %s4, [#allocation5]
    $region29: #{tpu_custom_call.1} parent=1 // pred_fallthru
      _
    // Predicated region
    $region30: #{tpu_custom_call.1} parent=1 // pred_check
      _
    $region31: #{tpu_custom_call.1} parent=1 // pred_check_branch
      %123 = sbr.rel (0) target = $region33
    $region32: #{tpu_custom_call.1} parent=1 // pred_region
      %s125 = ssub.s32 16, 16
      %126 = vsyncadd [#allocation10], %s125
      %s128 = sshll.u32 [#allocation9], 4
      %s129 = int_to_ptr.vmem [resolvable:$true] %s128
      %131 = dma.vmem_to_hbm [thread:$0]  %s129, 16, %s5, [#allocation10]
    $region33: #{tpu_custom_call.1} parent=1 // pred_fallthru
      _
    // Predicated region
    $region34: #{tpu_custom_call.1} parent=1 // pred_check
      _
    $region35: #{tpu_custom_call.1} parent=1 // pred_check_branch
      %133 = sbr.rel (0) target = $region37
    $region36: #{tpu_custom_call.1} parent=1 // pred_region
      %s135 = ssub.s32 16, 16
      %136 = vsyncadd [#allocation10], %s135
      %s138 = sshll.u32 [#allocation11], 4
      %s139 = int_to_ptr.vmem [resolvable:$true] %s138
      %141 = dma.vmem_to_hbm [thread:$0]  %s139, 16, %s6, [#allocation10]
    $region37: #{tpu_custom_call.1} parent=1 // pred_fallthru
      _
    // Predicated region
    $region38: #{tpu_custom_call.1} parent=1 // pred_check
      _
    $region39: #{tpu_custom_call.1} parent=1 // pred_check_branch
      %143 = sbr.rel (0) target = $region41
    $region40: #{tpu_custom_call.1} parent=1 // pred_region
      %144 = dma.done [#allocation5], 128
    $region41: #{tpu_custom_call.1} parent=1 // pred_fallthru
      _
    // Predicated region
    $region42: #{tpu_custom_call.1} parent=1 // pred_check
      _
    $region43: #{tpu_custom_call.1} parent=1 // pred_check_branch
      %146 = sbr.rel (0) target = $region45
    $region44: #{tpu_custom_call.1} parent=1 // pred_region
      %147 = dma.done [#allocation10], 16
    $region45: #{tpu_custom_call.1} parent=1 // pred_fallthru
      _
    // Predicated region
    $region46: #{tpu_custom_call.1} parent=1 // pred_check
      _
    $region47: #{tpu_custom_call.1} parent=1 // pred_check_branch
      %149 = sbr.rel (0) target = $region49
    $region48: #{tpu_custom_call.1} parent=1 // pred_region
      %150 = dma.done [#allocation10], 16
    $region49: #{tpu_custom_call.1} parent=1 // pred_fallthru
      _
    %151 = vsyncpa [#allocation4], 1
    %152 = vsyncpa [#allocation7], 1
    %153 = vsyncpa [#allocation5], 1
    %154 = vsyncpa [#allocation10], 1

</llo_original>
